<compile_context>
chip_gen: v5e
topology: v5e:2x2
jax: 0.10.0
libtpu: 0.0.40
codegen_flags: <defaults>
</compile_context>

<pallas_src>
import functools

import jax
import jax.numpy as jnp
from jax.experimental import pallas as pl
from jax.experimental.pallas import tpu as pltpu


def _round_up(x, m):
    return (x + m - 1) // m * m


def _pick_tile(hw_pad):
    """Largest lane tile in {2048,...,128} that divides hw_pad (hw_pad is a multiple of 128)."""
    for t in (2048, 1024, 512, 256, 128):
        if hw_pad % t == 0:
            return t
    return 128


def _pad2(rows, cols, itemsize):
    """VMEM footprint of a 2-D tile after (8, 128) layout padding."""
    return _round_up(rows, 8) * _round_up(cols, 128) * itemsize


@functools.partial(jax.jit, static_argnames=("out_dtype",))
def image_pool_forward(x, w_eff, bn_params, *, out_dtype=None):
    """x: (N, C, H, W); w_eff: (OC, C); bn_params: (OC, 4) = [a1, b1, a2, b2] columns.

    Accumulation is always f32; x / output may be bf16 for a half-bandwidth I/O path.
    """
    N, C, H, W = x.shape
    OC = w_eff.shape[0]
    HW = H * W
    out_dtype = jnp.dtype(out_dtype) if out_dtype is not None else x.dtype

    hw_pad = _round_up(HW, 128)
    tile = _pick_tile(hw_pad)
    n_tiles = hw_pad // tile

    xf = x.reshape(N, C, HW)
    if hw_pad != HW:
        # Zero padding is sum-neutral; divisor below is the true HW.
        xf = jnp.pad(xf, ((0, 0), (0, 0), (0, hw_pad - HW)))

    x_itemsize = jnp.dtype(x.dtype).itemsize
    out_itemsize = jnp.dtype(out_dtype).itemsize
    inv_hw = 1.0 / float(HW)

    # ------------------------------------------------------------------ pass 1: pooled head
    def pool_kernel(x_ref, w_ref, p_ref, o_ref, acc_ref):
        t_id = pl.program_id(1)

        @pl.when(t_id == 0)
        def _():
            acc_ref[...] = jnp.zeros_like(acc_ref)

        xt = x_ref[0].astype(jnp.float32)                           # (C, tile), lane-dense
        acc_ref[...] += jnp.sum(xt, axis=-1, keepdims=True)         # (C, 1)  XLU lane reduce

        @pl.when(t_id == pl.num_programs(1) - 1)
        def _():
            m = acc_ref[...] * inv_hw                               # (C, 1)  == avg pool
            w = w_ref[...].astype(jnp.float32)                      # (OC, C)
            z = jnp.dot(w, m, preferred_element_type=jnp.float32)   # (OC, 1) collapsed 1x1 conv
            p = p_ref[...].astype(jnp.float32)
            a1, b1 = p[:, 0:1], p[:, 1:2]
            a2, b2 = p[:, 2:3], p[:, 3:4]
            y = jnp.maximum(a1 * z + b1, 0.0)                       # ACNet BN + ReLU
            y = jnp.maximum(a2 * y + b2, 0.0)                       # _ConvBnReLU BN + ReLU
            o_ref[0] = y

    vmem_pool = (
        2 * _pad2(C, tile, x_itemsize)      # double-buffered x tile (the only big term)
        + 2 * _pad2(OC, C, 4)               # w (resident)
        + 2 * _pad2(OC, 4, 4)               # bn params (resident)
        + 2 * _pad2(OC, 1, 4)               # pooled output block
        + _pad2(C, 1, 4)                    # accumulator scratch
        + (4 << 20)                         # headroom / internal scratch
    )
    vmem_pool = int(min(64 << 20, max(vmem_pool, 16 << 20)))

    pooled = pl.pallas_call(
        pool_kernel,
        out_shape=jax.ShapeDtypeStruct((N, OC, 1), jnp.float32),
        grid_spec=pltpu.PrefetchScalarGridSpec(
            num_scalar_prefetch=0,
            grid=(N, n_tiles),
            in_specs=[
                pl.BlockSpec((1, C, tile), lambda n, t: (n, 0, t)),
                pl.BlockSpec((OC, C), lambda n, t: (0, 0)),
                pl.BlockSpec((OC, 4), lambda n, t: (0, 0)),
            ],
            out_specs=pl.BlockSpec((1, OC, 1), lambda n, t: (n, 0, 0)),
            scratch_shapes=[pltpu.VMEM((C, 1), jnp.float32)],
        ),
        compiler_params=pltpu.CompilerParams(
            dimension_semantics=("parallel", "arbitrary"),
            vmem_limit_bytes=vmem_pool,
        ),
    )(xf, w_eff, bn_params)

    # ---------------------------------------------------- pass 2: constant broadcast to HxW
    # bilinear 1x1 -> HxW with align_corners=False is a constant broadcast per channel.
    def broadcast_kernel(y_ref, o_ref):
        o_ref[...] = jnp.broadcast_to(y_ref[...], o_ref.shape).astype(o_ref.dtype)

    vmem_bc = 2 * _pad2(OC, tile, out_itemsize) + 2 * _pad2(OC, 1, 4) + (4 << 20)
    vmem_bc = int(min(64 << 20, max(vmem_bc, 16 << 20)))

    out = pl.pallas_call(
        broadcast_kernel,
        out_shape=jax.ShapeDtypeStruct((N, OC, hw_pad), out_dtype),
        grid_spec=pltpu.PrefetchScalarGridSpec(
            num_scalar_prefetch=0,
            grid=(N, n_tiles),
            in_specs=[pl.BlockSpec((1, OC, 1), lambda n, t: (n, 0, 0))],
            out_specs=pl.BlockSpec((1, OC, tile), lambda n, t: (n, 0, t)),
        ),
        compiler_params=pltpu.CompilerParams(
            # 2-D fully-parallel grid: keeps both v7x TensorCores busy even at N=1.
            dimension_semantics=("parallel", "parallel"),
            vmem_limit_bytes=vmem_bc,
        ),
    )(pooled)

    if hw_pad != HW:
        out = out[:, :, :HW]
    return out.reshape(N, OC, H, W)


def init_image_pool_params(key, in_ch, out_ch):
    """Deterministic synthetic parameters matching _ImagePool's module shapes."""
    ks = jax.random.split(key, 5)
    # ACNet conv weights for kernel_size=1: conv_3x3 is (OC,C,1,1), conv_1x3 is (OC,C,1,3),
    # conv_3x1 is (OC,C,3,1).  On a 1x1 (pooled) input only the center taps contribute.
    w3 = 0.1 * jax.random.normal(ks[0], (out_ch, in_ch, 1, 1), jnp.float32)
    w13 = 0.1 * jax.random.normal(ks[1], (out_ch, in_ch, 1, 3), jnp.float32)
    w31 = 0.1 * jax.random.normal(ks[2], (out_ch, in_ch, 3, 1), jnp.float32)
    w_eff = w3[:, :, 0, 0] + w13[:, :, 0, 1] + w31[:, :, 1, 0]        # (OC, C)

    def make_bn(k, eps):
        k1, k2, k3, k4 = jax.random.split(k, 4)
        gamma = 1.0 + 0.1 * jax.random.normal(k1, (out_ch,), jnp.float32)
        beta = 0.1 * jax.random.normal(k2, (out_ch,), jnp.float32)
        rmean = 0.1 * jax.random.normal(k3, (out_ch,), jnp.float32)
        rvar = jnp.abs(1.0 + 0.1 * jax.random.normal(k4, (out_ch,), jnp.float32))
        a = gamma / jnp.sqrt(rvar + eps)
        b = beta - rmean * a
        return a, b

    a1, b1 = make_bn(ks[3], 1e-5)   # ACNet's internal BatchNorm2d
    a2, b2 = make_bn(ks[4], 1e-5)   # _ConvBnReLU's BatchNorm2d
    bn_params = jnp.stack([a1, b1, a2, b2], axis=1)                    # (OC, 4)
    return w_eff, bn_params


def image_pool_reference(x, w_eff, bn_params):
    """Pure-JAX reference with the PyTorch op order (pool -> conv -> bn/relu x2 -> upsample)."""
    N, C, H, W = x.shape
    OC = w_eff.shape[0]
    m = jnp.mean(x, axis=(2, 3))                       # (N, C)  AdaptiveAvgPool2d(1)
    z = m @ w_eff.T                                    # (N, OC) collapsed ACNet 1x1 conv
    a1, b1, a2, b2 = (bn_params[:, i] for i in range(4))
    y = jnp.maximum(a1 * z + b1, 0.0)
    y = jnp.maximum(a2 * y + b2, 0.0)
    return jnp.broadcast_to(y[:, :, None, None], (N, OC, H, W))


if __name__ == "__main__":
    N, C, OC, H, W = 2, 4, 8, 16, 16
    key = jax.random.PRNGKey(0)
    kx, kx2, kp = jax.random.split(key, 3)
    x = jax.random.normal(kx, (N, C, H, W), jnp.float32)
    w_eff, bn_params = init_image_pool_params(kp, C, OC)

    out = jax.block_until_ready(image_pool_forward(x, w_eff, bn_params))
    ref = image_pool_reference(x, w_eff, bn_params)
    assert out.shape == (N, OC, H, W)
    assert jnp.allclose(out, ref, rtol=1e-4, atol=1e-5), "mismatch vs reference (aligned HW)"

    # Non-128-aligned spatial size: exercises the HW zero-pad + tail-slice path.
    x2 = jax.random.normal(kx2, (2, C, 5, 7), jnp.float32)
    out2 = jax.block_until_ready(image_pool_forward(x2, w_eff, bn_params))
    ref2 = image_pool_reference(x2, w_eff, bn_params)
    assert out2.shape == (2, OC, 5, 7)
    assert jnp.allclose(out2, ref2, rtol=1e-4, atol=1e-5), "mismatch vs reference (ragged HW)"

    print("KERNEL_OK")
</pallas_src>

<mosaic_0001>
module attributes {stable_mosaic.version = 11 : i64} {
  func.func @pool_kernel(%arg0: i32, %arg1: i32, %arg2: memref<1x4x256xf32, #tpu.memory_space<vmem>>, %arg3: memref<8x4xf32, #tpu.memory_space<vmem>>, %arg4: memref<8x4xf32, #tpu.memory_space<vmem>>, %arg5: memref<1x8x1xf32, #tpu.memory_space<vmem>>, %arg6: memref<4x1xf32, #tpu.memory_space<vmem>>) attributes {dimension_semantics = [#tpu.dimension_semantics<parallel>, #tpu.dimension_semantics<arbitrary>], iteration_bounds = array<i64: 2, 1>, scalar_prefetch = 0 : i64, scratch_operands = 1 : i64, tpu.core_type = #tpu.core_type<tc>, window_params = [{transform_indices = @transform_0, window_bounds = array<i64: 1, 4, 256>}, {pipeline_mode = #tpu.pipeline_mode<synchronous>, transform_indices = @transform_1, window_bounds = array<i64: 8, 4>}, {pipeline_mode = #tpu.pipeline_mode<synchronous>, transform_indices = @transform_2, window_bounds = array<i64: 8, 4>}, {transform_indices = @transform_3, window_bounds = array<i64: 1, 8, 1>}]} {
    %c0_i32 = arith.constant 0 : i32
    %0 = arith.cmpi eq, %arg1, %c0_i32 : i32
    %1 = arith.extui %0 : i1 to i32
    %c0_i32_0 = arith.constant 0 : i32
    %2 = arith.cmpi ne, %1, %c0_i32_0 : i32
    scf.if %2 {
      %cst_9 = arith.constant 0.000000e+00 : f32
      %13 = vector.broadcast %cst_9 : f32 to vector<4x1xf32>
      %c0_10 = arith.constant 0 : index
      %c0_11 = arith.constant 0 : index
      %14 = vector.load %arg6[%c0_10, %c0_11] : memref<4x1xf32, #tpu.memory_space<vmem>>, vector<4x1xf32>
      tpu.vector_store %arg6[%c0_10, %c0_11], %13 {strides = array<i32>} : memref<4x1xf32, #tpu.memory_space<vmem>>, vector<4x1xf32>,
    } else {
    }
    %c0 = arith.constant 0 : index
    %c0_1 = arith.constant 0 : index
    %c0_2 = arith.constant 0 : index
    %3 = vector.load %arg2[%c0, %c0_1, %c0_2] : memref<1x4x256xf32, #tpu.memory_space<vmem>>, vector<1x4x256xf32>
    %4 = vector.shape_cast %3 : vector<1x4x256xf32> to vector<4x256xf32>
    %c0_3 = arith.constant 0 : index
    %c0_4 = arith.constant 0 : index
    %5 = vector.load %arg6[%c0_3, %c0_4] : memref<4x1xf32, #tpu.memory_space<vmem>>, vector<4x1xf32>
    %cst = arith.constant dense<0.000000e+00> : vector<4xf32>
    %6 = vector.multi_reduction <add>, %4, %cst [1] : vector<4x256xf32> to vector<4xf32>
    %7 = vector.shape_cast %6 : vector<4xf32> to vector<4x1xf32>
    %8 = arith.addf %5, %7 : vector<4x1xf32>
    %c0_5 = arith.constant 0 : index
    %c0_6 = arith.constant 0 : index
    %9 = vector.load %arg6[%c0_5, %c0_6] : memref<4x1xf32, #tpu.memory_space<vmem>>, vector<4x1xf32>
    tpu.vector_store %arg6[%c0_5, %c0_6], %8 {strides = array<i32>} : memref<4x1xf32, #tpu.memory_space<vmem>>, vector<4x1xf32>,
    %c0_i32_7 = arith.constant 0 : i32
    %10 = arith.cmpi eq, %arg1, %c0_i32_7 : i32
    %11 = arith.extui %10 : i1 to i32
    %c0_i32_8 = arith.constant 0 : i32
    %12 = arith.cmpi ne, %11, %c0_i32_8 : i32
    scf.if %12 {
      %c0_9 = arith.constant 0 : index
      %c0_10 = arith.constant 0 : index
      %13 = vector.load %arg6[%c0_9, %c0_10] : memref<4x1xf32, #tpu.memory_space<vmem>>, vector<4x1xf32>
      %cst_11 = arith.constant 3.906250e-03 : f32
      %14 = vector.broadcast %cst_11 : f32 to vector<4x1xf32>
      %15 = arith.mulf %13, %14 : vector<4x1xf32>
      %c0_12 = arith.constant 0 : index
      %c0_13 = arith.constant 0 : index
      %16 = vector.load %arg3[%c0_12, %c0_13] : memref<8x4xf32, #tpu.memory_space<vmem>>, vector<8x4xf32>
      %cst_14 = arith.constant dense<0.000000e+00> : vector<8x1xf32>
      %17 = tpu.matmul %16, %15, %cst_14 {dimension_numbers = #tpu.dot_dimension_numbers<[1], [0], [0], [1], [0, 0, 1, 1], [], []>} : vector<8x4xf32>, vector<4x1xf32>, vector<8x1xf32> -> vector<8x1xf32>
      %c0_15 = arith.constant 0 : index
      %c0_16 = arith.constant 0 : index
      %18 = vector.load %arg4[%c0_15, %c0_16] : memref<8x4xf32, #tpu.memory_space<vmem>>, vector<8x4xf32>
      %19 = vector.extract_strided_slice %18 {offsets = [0, 0], sizes = [8, 1], strides = [1, 1]} : vector<8x4xf32> to vector<8x1xf32>
      %20 = vector.extract_strided_slice %18 {offsets = [0, 1], sizes = [8, 1], strides = [1, 1]} : vector<8x4xf32> to vector<8x1xf32>
      %21 = vector.extract_strided_slice %18 {offsets = [0, 2], sizes = [8, 1], strides = [1, 1]} : vector<8x4xf32> to vector<8x1xf32>
      %22 = vector.extract_strided_slice %18 {offsets = [0, 3], sizes = [8, 1], strides = [1, 1]} : vector<8x4xf32> to vector<8x1xf32>
      %23 = arith.mulf %19, %17 : vector<8x1xf32>
      %24 = arith.addf %23, %20 : vector<8x1xf32>
      %cst_17 = arith.constant 0.000000e+00 : f32
      %25 = vector.broadcast %cst_17 : f32 to vector<8x1xf32>
      %26 = arith.maximumf %24, %25 : vector<8x1xf32>
      %27 = arith.mulf %21, %26 : vector<8x1xf32>
      %28 = arith.addf %27, %22 : vector<8x1xf32>
      %cst_18 = arith.constant 0.000000e+00 : f32
      %29 = vector.broadcast %cst_18 : f32 to vector<8x1xf32>
      %30 = arith.maximumf %28, %29 : vector<8x1xf32>
      %c0_19 = arith.constant 0 : index
      %c0_20 = arith.constant 0 : index
      %c0_21 = arith.constant 0 : index
      %31 = vector.load %arg5[%c0_19, %c0_20, %c0_21] : memref<1x8x1xf32, #tpu.memory_space<vmem>>, vector<1x8x1xf32>
      %32 = vector.shape_cast %31 : vector<1x8x1xf32> to vector<8x1xf32>
      %33 = vector.shape_cast %30 : vector<8x1xf32> to vector<1x8x1xf32>
      tpu.vector_store %arg5[%c0_19, %c0_20, %c0_21], %33 {strides = array<i32>} : memref<1x8x1xf32, #tpu.memory_space<vmem>>, vector<1x8x1xf32>,
    } else {
    }
    return
  }
  func.func @transform_0(%arg0: i32, %arg1: i32) -> (i32, i32, i32) {
    %c0_i32 = arith.constant 0 : i32
    %c0_i32_0 = arith.constant 0 : i32
    return %arg0, %c0_i32, %arg1 : i32, i32, i32
  }
  func.func @transform_1(%arg0: i32, %arg1: i32) -> (i32, i32) {
    %c0_i32 = arith.constant 0 : i32
    %c0_i32_0 = arith.constant 0 : i32
    %c0_i32_1 = arith.constant 0 : i32
    return %c0_i32, %c0_i32_0 : i32, i32
  }
  func.func @transform_2(%arg0: i32, %arg1: i32) -> (i32, i32) {
    %c0_i32 = arith.constant 0 : i32
    %c0_i32_0 = arith.constant 0 : i32
    %c0_i32_1 = arith.constant 0 : i32
    return %c0_i32, %c0_i32_0 : i32, i32
  }
  func.func @transform_3(%arg0: i32, %arg1: i32) -> (i32, i32, i32) {
    %c0_i32 = arith.constant 0 : i32
    %c0_i32_0 = arith.constant 0 : i32
    %c0_i32_1 = arith.constant 0 : i32
    return %arg0, %c0_i32, %c0_i32_0 : i32, i32, i32
  }
}

module attributes {stable_mosaic.version = 11 : i64} {
  func.func @broadcast_kernel(%arg0: i32, %arg1: i32, %arg2: memref<1x8x1xf32, #tpu.memory_space<vmem>>, %arg3: memref<1x8x256xf32, #tpu.memory_space<vmem>>) attributes {dimension_semantics = [#tpu.dimension_semantics<parallel>, #tpu.dimension_semantics<parallel>], iteration_bounds = array<i64: 2, 1>, scalar_prefetch = 0 : i64, scratch_operands = 0 : i64, tpu.core_type = #tpu.core_type<tc>, window_params = [{transform_indices = @transform_0, window_bounds = array<i64: 1, 8, 1>}, {transform_indices = @transform_1, window_bounds = array<i64: 1, 8, 256>}]} {
    %c0 = arith.constant 0 : index
    %c0_0 = arith.constant 0 : index
    %c0_1 = arith.constant 0 : index
    %0 = vector.load %arg2[%c0, %c0_0, %c0_1] : memref<1x8x1xf32, #tpu.memory_space<vmem>>, vector<1x8x1xf32>
    %1 = vector.shape_cast %0 : vector<1x8x1xf32> to vector<1x8x1xf32>
    %2 = vector.broadcast %1 : vector<1x8x1xf32> to vector<1x8x256xf32>
    %c0_2 = arith.constant 0 : index
    %c0_3 = arith.constant 0 : index
    %c0_4 = arith.constant 0 : index
    %3 = vector.load %arg3[%c0_2, %c0_3, %c0_4] : memref<1x8x256xf32, #tpu.memory_space<vmem>>, vector<1x8x256xf32>
    tpu.vector_store %arg3[%c0_2, %c0_3, %c0_4], %2 {strides = array<i32>} : memref<1x8x256xf32, #tpu.memory_space<vmem>>, vector<1x8x256xf32>,
    return
  }
  func.func @transform_0(%arg0: i32, %arg1: i32) -> (i32, i32, i32) {
    %c0_i32 = arith.constant 0 : i32
    %c0_i32_0 = arith.constant 0 : i32
    %c0_i32_1 = arith.constant 0 : i32
    return %arg0, %c0_i32, %c0_i32_0 : i32, i32, i32
  }
  func.func @transform_1(%arg0: i32, %arg1: i32) -> (i32, i32, i32) {
    %c0_i32 = arith.constant 0 : i32
    %c0_i32_0 = arith.constant 0 : i32
    return %arg0, %c0_i32, %arg1 : i32, i32, i32
  }
}

</mosaic_0001>

<llo_original>
// kernel: image_pool_forward.3
$region0: #{image_pool_forward.3}
  #allocation0 [shape = 'u32[]', space=smem, size = 0x4, offset = 0x4, fixed_abs, tag = 'smem constant byte address 0x4 - core index']
  #allocation1 [shape = 'u32[72,128]{1,0:T(1,128)}', space=vmem, size = 0x9000, scoped, tag = 'internal scratch']
  %s0 = inlined_call_operand.vmem [shape: f32[2,8,1], index: 0, kind: input, shape index: {}]
  %s1 = inlined_call_operand.vmem [shape: f32[2,8,256], index: 1, kind: output, shape index: {}]
  %s2 = sld [smem:[#allocation0]]
  $region37: #{image_pool_forward.3} parent=0
    _
  %s4 = ssub.s32 1, %s2
  %s5 = scalar_select 0, %s4, %s2
  loop: start=0, step=1, limit=4
  $region2: #{image_pool_forward.3} parent=0 // loop_pre_header
    _
  $region3: #{image_pool_forward.3} parent=0 // loop_header
    %s7 = sphi 0, %s11
    %p8 = scmp.ge.s32.totalorder %s7, 4
    %s14 = sphi 0, %s26
    %s15 = sphi 0, %s22
    %s16 = sphi 0, %s14
    %s17 = sphi 0, %s15
    %s18 = sphi 0, %s16
    %s19 = sphi 0, %s17
    %s29 = sphi 0, %s31
    %s32 = sphi 0, %s29
    %s33 = sphi 0, %s32
    %s49 = sphi 0, %s33
    %s57 = sphi 0, %s59
    %s60 = sphi 0, %s57
    %s61 = sphi 0, %s60
    %s77 = sphi 0, %s61
  $region4: #{image_pool_forward.3} parent=0 // loop_header_branch
    %10 = sbr.rel (%p8) target = $region8
  $region5: #{image_pool_forward.3} parent=0 // loop_body
    %s12 = ssub.s32 %s7, 1
    %s13 = ssub.s32 %s7, 2
    %s20 = sadd.s32 1, %s15
    %p21 = scmp.ge.s32.totalorder %s20, 1
    %s22 = scalar_select %p21, 0, %s20
    %s23 = sadd.s32 1, %s14
    %s24 = scalar_select %p21, %s23, %s14
    %p25 = scmp.ge.s32.totalorder %s24, 2
    %s26 = scalar_select %p25, 0, %s24
    %s27 = ssub.s32 %s14, %s26
    %p28 = scmp.eq.s32.totalorder %s27, 0
    %s30 = sadd.s32 %s29, 1
    %s31 = scalar_select %p28, %s29, %s30
    %p34 = pneg %p28
    %p35 = scmp.eq.s32.totalorder %s7, 1
    %p36 = por %p34, %p35
    %p37 = scmp.ne.s32.totalorder %s29, %s32
    %p38 = scmp.eq.s32.totalorder %s7, 0
    %p39 = por %p37, %p38
    %p40 = scmp.ne.s32.totalorder %s29, %s32
    %p41 = scmp.eq.s32.totalorder %s12, 1
    %p42 = por %p40, %p41
    %p43 = scmp.ne.s32.totalorder %s32, %s33
    %p44 = scmp.eq.s32.totalorder %s12, 0
    %p45 = por %p43, %p44
    %p46 = scmp.ne.s32.totalorder %s32, %s33
    %p47 = scmp.eq.s32.totalorder %s13, 1
    %p48 = por %p46, %p47
    %p50 = scmp.ne.s32.totalorder %s33, %s49
    %p51 = scmp.eq.s32.totalorder %s13, 0
    %p52 = por %p50, %p51
    %s53 = ssub.s32 %s14, %s26
    %s54 = ssub.s32 %s15, %s22
    %s55 = sor.u32 %s53, %s54
    %p56 = scmp.eq.s32.totalorder %s55, 0
    %s58 = sadd.s32 %s57, 1
    %s59 = scalar_select %p56, %s57, %s58
    %p62 = pneg %p56
    %p63 = scmp.eq.s32.totalorder %s7, 1
    %p64 = por %p62, %p63
    %p65 = scmp.ne.s32.totalorder %s57, %s60
    %p66 = scmp.eq.s32.totalorder %s7, 0
    %p67 = por %p65, %p66
    %p68 = scmp.ne.s32.totalorder %s57, %s60
    %p69 = scmp.eq.s32.totalorder %s12, 1
    %p70 = por %p68, %p69
    %p71 = scmp.ne.s32.totalorder %s60, %s61
    %p72 = scmp.eq.s32.totalorder %s12, 0
    %p73 = por %p71, %p72
    %p74 = scmp.ne.s32.totalorder %s60, %s61
    %p75 = scmp.eq.s32.totalorder %s13, 1
    %p76 = por %p74, %p75
    %p78 = scmp.ne.s32.totalorder %s61, %s77
    %p79 = scmp.eq.s32.totalorder %s13, 0
    %p80 = por %p78, %p79
    %p81 = scmp.le.s32.totalorder 1, %s7
    %p82 = scmp.lt.s32.totalorder %s7, 3
    %p83 = pnand %p81, %p82
    %p84 = pneg %p83
    // Predicated region
    $region9: #{image_pool_forward.3} parent=5 // pred_check
      _
    $region10: #{image_pool_forward.3} parent=5 // pred_check_branch
      %86 = sbr.rel (%p83) target = $region12
    $region11: #{image_pool_forward.3} parent=5 // pred_region
      %s87 = ssub.s32 %s7, 1
    $region12: #{image_pool_forward.3} parent=5 // pred_fallthru
      _
    %p88 = scmp.lt.s32.totalorder %s7, 2
    // Predicated region
    $region13: #{image_pool_forward.3} parent=5 // pred_check
      %p89 = pneg %p88
    $region14: #{image_pool_forward.3} parent=5 // pred_check_branch
      %91 = sbr.rel (%p89) target = $region16
    $region15: #{image_pool_forward.3} parent=5 // pred_region
      // Predicated region
      $region17: #{image_pool_forward.3} parent=15 // pred_check
        %p92 = pneg %p39
      $region18: #{image_pool_forward.3} parent=15 // pred_check_branch
        %94 = sbr.rel (%p92) target = $region20
      $region19: #{image_pool_forward.3} parent=15 // pred_region
        %p95 = scmp.lt.s32.totalorder %s14, 1
        %s96 = scalar_select %p95, %s14, 1
        %s97 = smul.addr %s96, 8
        %s98 = scalar_lea.vmem %s0, %s97
      $region20: #{image_pool_forward.3} parent=15 // pred_fallthru
        _
    $region16: #{image_pool_forward.3} parent=5 // pred_fallthru
      _
    %p99 = scmp.le.s32.totalorder 1, %s7
    %p100 = scmp.lt.s32.totalorder %s7, 3
    %p101 = pnand %p99, %p100
    %p102 = pneg %p101
    // Predicated region
    $region21: #{image_pool_forward.3} parent=5 // pred_check
      _
    $region22: #{image_pool_forward.3} parent=5 // pred_check_branch
      %104 = sbr.rel (%p101) target = $region24
    $region23: #{image_pool_forward.3} parent=5 // pred_region
      %s105 = ssub.s32 %s7, 1
      %p106 = scmp.lt.s32.totalorder %s16, 1
      %s107 = scalar_select %p106, %s16, 1
      %s108 = smul.addr %s107, 8
      %s109 = scalar_lea.vmem %s0, %s108
      %p110 = pneg %p45
      %p111 = pneg %p42
      %p112 = pneg %p73
      %p113 = pneg %p70
      %s114 = smul.u32 2, %s17
      %p115 = scmp.lt.s32.totalorder %s16, 1
      %s116 = scalar_select %p115, %s16, 1
      %p117 = scmp.lt.s32.totalorder %s114, 1
      %s118 = scalar_select %p117, %s114, 1
      %s119 = smul.addr %s116, 2
      %s120 = sadd.s32 %s118, %s119
      %s121 = smul.addr %s120, 8
      %s122 = scalar_lea.vmem %s1, %s121
      %p123 = scmp.lt.s32.totalorder %s16, 1
      %s124 = scalar_select %p123, %s16, 1
      %s125 = smul.addr %s124, 8
      %s126 = scalar_lea.vmem %s0, %s125
      %s127 = smul.u32 2, %s17
      %p128 = scmp.lt.s32.totalorder %s16, 1
      %s129 = scalar_select %p128, %s16, 1
      %p130 = scmp.lt.s32.totalorder %s127, 1
      %s131 = scalar_select %p130, %s127, 1
      %s132 = smul.addr %s129, 2
      %s133 = sadd.s32 %s131, %s132
      %s134 = smul.addr %s133, 8
      %s135 = scalar_lea.vmem %s1, %s134
      %s136 = smul.u32 2, %s17
      %v137 = vld [vmem:[%s126] sm:$0xff]
      %139 = vset.pattern.permute.xlu0 0
      %140 = vperm.xlu0 %139, %v137
      %v141 = vpop.permute.xlu0 %140
      %143 = vst [vmem:[%s135] sm:$0xff] %v141
      %144 = vst [vmem:[%s135 + $0x8] sm:$0xff] %v141
      %s145 = smul.u32 2, %s17
      %p146 = scmp.lt.s32.totalorder %s16, 1
      %s147 = scalar_select %p146, %s16, 1
      %p148 = scmp.lt.s32.totalorder %s145, 1
      %s149 = scalar_select %p148, %s145, 1
      %s150 = smul.addr %s147, 2
      %s151 = sadd.s32 %s149, %s150
      %s152 = smul.addr %s151, 8
      %s153 = scalar_lea.vmem %s1, %s152
      // Predicated region
      $region25: #{image_pool_forward.3} parent=23 // pred_check
        %p154 = pneg %p70
      $region26: #{image_pool_forward.3} parent=23 // pred_check_branch
        %156 = sbr.rel (%p154) target = $region28
      $region27: #{image_pool_forward.3} parent=23 // pred_region
        %s157 = smul.u32 2, %s17
      $region28: #{image_pool_forward.3} parent=23 // pred_fallthru
        _
    $region24: #{image_pool_forward.3} parent=5 // pred_fallthru
      _
    %p158 = scmp.le.s32.totalorder 2, %s7
    // Predicated region
    $region29: #{image_pool_forward.3} parent=5 // pred_check
      %p159 = pneg %p158
    $region30: #{image_pool_forward.3} parent=5 // pred_check_branch
      %161 = sbr.rel (%p159) target = $region32
    $region31: #{image_pool_forward.3} parent=5 // pred_region
      %s162 = ssub.s32 %s7, 2
      // Predicated region
      $region33: #{image_pool_forward.3} parent=31 // pred_check
        %p163 = pneg %p76
      $region34: #{image_pool_forward.3} parent=31 // pred_check_branch
        %165 = sbr.rel (%p163) target = $region36
      $region35: #{image_pool_forward.3} parent=31 // pred_region
        %s166 = smul.u32 2, %s19
        %p167 = scmp.lt.s32.totalorder %s18, 1
        %s168 = scalar_select %p167, %s18, 1
        %p169 = scmp.lt.s32.totalorder %s166, 1
        %s170 = scalar_select %p169, %s166, 1
        %s171 = smul.addr %s168, 2
        %s172 = sadd.s32 %s170, %s171
        %s173 = smul.addr %s172, 8
        %s174 = scalar_lea.vmem %s1, %s173
      $region36: #{image_pool_forward.3} parent=31 // pred_fallthru
        _
    $region32: #{image_pool_forward.3} parent=5 // pred_fallthru
      _
  $region6: #{image_pool_forward.3} parent=0 // loop_footer
    %s11 = sadd.s32 1, %s7
  $region7: #{image_pool_forward.3} parent=0 // loop_footer_branch
    %6 = sbr.rel target = $region3
  $region8: #{image_pool_forward.3} parent=0 // loop_exit
    _

// kernel: image_pool_forward.2
$region0: #{image_pool_forward.2}
  #allocation0 [shape = 'u32[]', space=smem, size = 0x4, offset = 0x4, fixed_abs, tag = 'smem constant byte address 0x4 - core index']
  #allocation1 [shape = 'u32[72,128]{1,0:T(1,128)}', space=vmem, size = 0x9000, scoped, tag = 'internal scratch']
  #allocation2 [shape = 'f32[4,1]{1,0:T(4,128)}', space=vmem, size = 0x800, scoped, tag = 'scratch operand']
  %s0 = inlined_call_operand.vmem [shape: f32[2,4,256], index: 0, kind: input, shape index: {}]
  %s1 = inlined_call_operand.vmem [shape: f32[8,4], index: 1, kind: input, shape index: {}]
  %s2 = inlined_call_operand.vmem [shape: f32[8,4], index: 2, kind: input, shape index: {}]
  %s3 = inlined_call_operand.vmem [shape: f32[2,8,1], index: 3, kind: output, shape index: {}]
  %s4 = sld [smem:[#allocation0]]
  $region53: #{image_pool_forward.2} parent=0
    _
  %s6 = ssub.s32 1, %s4
  %s7 = scalar_select 0, %s6, %s4
  loop: start=0, step=1, limit=4
  $region2: #{image_pool_forward.2} parent=0 // loop_pre_header
    _
  $region3: #{image_pool_forward.2} parent=0 // loop_header
    %s9 = sphi 0, %s13
    %p10 = scmp.ge.s32.totalorder %s9, 4
    %s16 = sphi 0, %s28
    %s17 = sphi 0, %s24
    %s18 = sphi 0, %s16
    %s19 = sphi 0, %s17
    %s20 = sphi 0, %s18
    %s21 = sphi 0, %s19
    %s33 = sphi 0, %s35
    %s36 = sphi 0, %s33
    %s37 = sphi 0, %s36
    %s53 = sphi 0, %s37
    %s57 = sphi 0, %s57
    %s59 = sphi 0, %s57
    %s60 = sphi 0, %s59
    %s74 = sphi 0, %s60
    %s78 = sphi 0, %s78
    %s80 = sphi 0, %s78
    %s81 = sphi 0, %s80
    %s95 = sphi 0, %s81
    %s101 = sphi 0, %s103
    %s104 = sphi 0, %s101
    %s105 = sphi 0, %s104
    %s121 = sphi 0, %s105
  $region4: #{image_pool_forward.2} parent=0 // loop_header_branch
    %12 = sbr.rel (%p10) target = $region8
  $region5: #{image_pool_forward.2} parent=0 // loop_body
    %s14 = ssub.s32 %s9, 1
    %s15 = ssub.s32 %s9, 2
    %s22 = sadd.s32 1, %s17
    %p23 = scmp.ge.s32.totalorder %s22, 1
    %s24 = scalar_select %p23, 0, %s22
    %s25 = sadd.s32 1, %s16
    %s26 = scalar_select %p23, %s25, %s16
    %p27 = scmp.ge.s32.totalorder %s26, 2
    %s28 = scalar_select %p27, 0, %s26
    %s29 = ssub.s32 %s16, %s28
    %s30 = ssub.s32 %s17, %s24
    %s31 = sor.u32 %s29, %s30
    %p32 = scmp.eq.s32.totalorder %s31, 0
    %s34 = sadd.s32 %s33, 1
    %s35 = scalar_select %p32, %s33, %s34
    %p38 = pneg %p32
    %p39 = scmp.eq.s32.totalorder %s9, 1
    %p40 = por %p38, %p39
    %p41 = scmp.ne.s32.totalorder %s33, %s36
    %p42 = scmp.eq.s32.totalorder %s9, 0
    %p43 = por %p41, %p42
    %p44 = scmp.ne.s32.totalorder %s33, %s36
    %p45 = scmp.eq.s32.totalorder %s14, 1
    %p46 = por %p44, %p45
    %p47 = scmp.ne.s32.totalorder %s36, %s37
    %p48 = scmp.eq.s32.totalorder %s14, 0
    %p49 = por %p47, %p48
    %p50 = scmp.ne.s32.totalorder %s36, %s37
    %p51 = scmp.eq.s32.totalorder %s15, 1
    %p52 = por %p50, %p51
    %p54 = scmp.ne.s32.totalorder %s37, %s53
    %p55 = scmp.eq.s32.totalorder %s15, 0
    %p56 = por %p54, %p55
    %s58 = sadd.s32 %s57, 1
    %p61 = scmp.eq.s32.totalorder %s9, 1
    %p62 = scmp.ne.s32.totalorder %s57, %s59
    %p63 = scmp.eq.s32.totalorder %s9, 0
    %p64 = por %p62, %p63
    %p65 = scmp.ne.s32.totalorder %s57, %s59
    %p66 = scmp.eq.s32.totalorder %s14, 1
    %p67 = por %p65, %p66
    %p68 = scmp.ne.s32.totalorder %s59, %s60
    %p69 = scmp.eq.s32.totalorder %s14, 0
    %p70 = por %p68, %p69
    %p71 = scmp.ne.s32.totalorder %s59, %s60
    %p72 = scmp.eq.s32.totalorder %s15, 1
    %p73 = por %p71, %p72
    %p75 = scmp.ne.s32.totalorder %s60, %s74
    %p76 = scmp.eq.s32.totalorder %s15, 0
    %p77 = por %p75, %p76
    %s79 = sadd.s32 %s78, 1
    %p82 = scmp.eq.s32.totalorder %s9, 1
    %p83 = scmp.ne.s32.totalorder %s78, %s80
    %p84 = scmp.eq.s32.totalorder %s9, 0
    %p85 = por %p83, %p84
    %p86 = scmp.ne.s32.totalorder %s78, %s80
    %p87 = scmp.eq.s32.totalorder %s14, 1
    %p88 = por %p86, %p87
    %p89 = scmp.ne.s32.totalorder %s80, %s81
    %p90 = scmp.eq.s32.totalorder %s14, 0
    %p91 = por %p89, %p90
    %p92 = scmp.ne.s32.totalorder %s80, %s81
    %p93 = scmp.eq.s32.totalorder %s15, 1
    %p94 = por %p92, %p93
    %p96 = scmp.ne.s32.totalorder %s81, %s95
    %p97 = scmp.eq.s32.totalorder %s15, 0
    %p98 = por %p96, %p97
    %s99 = ssub.s32 %s16, %s28
    %p100 = scmp.eq.s32.totalorder %s99, 0
    %s102 = sadd.s32 %s101, 1
    %s103 = scalar_select %p100, %s101, %s102
    %p106 = pneg %p100
    %p107 = scmp.eq.s32.totalorder %s9, 1
    %p108 = por %p106, %p107
    %p109 = scmp.ne.s32.totalorder %s101, %s104
    %p110 = scmp.eq.s32.totalorder %s9, 0
    %p111 = por %p109, %p110
    %p112 = scmp.ne.s32.totalorder %s101, %s104
    %p113 = scmp.eq.s32.totalorder %s14, 1
    %p114 = por %p112, %p113
    %p115 = scmp.ne.s32.totalorder %s104, %s105
    %p116 = scmp.eq.s32.totalorder %s14, 0
    %p117 = por %p115, %p116
    %p118 = scmp.ne.s32.totalorder %s104, %s105
    %p119 = scmp.eq.s32.totalorder %s15, 1
    %p120 = por %p118, %p119
    %p122 = scmp.ne.s32.totalorder %s105, %s121
    %p123 = scmp.eq.s32.totalorder %s15, 0
    %p124 = por %p122, %p123
    %p125 = scmp.le.s32.totalorder 1, %s9
    %p126 = scmp.lt.s32.totalorder %s9, 3
    %p127 = pnand %p125, %p126
    %p128 = pneg %p127
    // Predicated region
    $region9: #{image_pool_forward.2} parent=5 // pred_check
      _
    $region10: #{image_pool_forward.2} parent=5 // pred_check_branch
      %130 = sbr.rel (%p127) target = $region12
    $region11: #{image_pool_forward.2} parent=5 // pred_region
      %s131 = ssub.s32 %s9, 1
      // Predicated region
      $region13: #{image_pool_forward.2} parent=11 // pred_check
        %p132 = pneg %p70
      $region14: #{image_pool_forward.2} parent=11 // pred_check_branch
        %134 = sbr.rel (%p132) target = $region16
      $region15: #{image_pool_forward.2} parent=11 // pred_region
        _
      $region16: #{image_pool_forward.2} parent=11 // pred_fallthru
        _
      // Predicated region
      $region17: #{image_pool_forward.2} parent=11 // pred_check
        %p135 = pneg %p91
      $region18: #{image_pool_forward.2} parent=11 // pred_check_branch
        %137 = sbr.rel (%p135) target = $region20
      $region19: #{image_pool_forward.2} parent=11 // pred_region
        _
      $region20: #{image_pool_forward.2} parent=11 // pred_fallthru
        _
    $region12: #{image_pool_forward.2} parent=5 // pred_fallthru
      _
    %p138 = scmp.lt.s32.totalorder %s9, 2
    // Predicated region
    $region21: #{image_pool_forward.2} parent=5 // pred_check
      %p139 = pneg %p138
    $region22: #{image_pool_forward.2} parent=5 // pred_check_branch
      %141 = sbr.rel (%p139) target = $region24
    $region23: #{image_pool_forward.2} parent=5 // pred_region
      // Predicated region
      $region25: #{image_pool_forward.2} parent=23 // pred_check
        %p142 = pneg %p43
      $region26: #{image_pool_forward.2} parent=23 // pred_check_branch
        %144 = sbr.rel (%p142) target = $region28
      $region27: #{image_pool_forward.2} parent=23 // pred_region
        %s145 = smul.u32 2, %s17
        %p146 = scmp.lt.s32.totalorder %s16, 1
        %s147 = scalar_select %p146, %s16, 1
        %p148 = scmp.lt.s32.totalorder %s145, 1
        %s149 = scalar_select %p148, %s145, 1
        %s150 = smul.addr %s147, 2
        %s151 = sadd.s32 %s149, %s150
        %s152 = smul.addr %s151, 4
        %s153 = scalar_lea.vmem %s0, %s152
        %s154 = smul.u32 2, %s17
      $region28: #{image_pool_forward.2} parent=23 // pred_fallthru
        _
    $region24: #{image_pool_forward.2} parent=5 // pred_fallthru
      _
    %p155 = scmp.le.s32.totalorder 1, %s9
    %p156 = scmp.lt.s32.totalorder %s9, 3
    %p157 = pnand %p155, %p156
    %p158 = pneg %p157
    // Predicated region
    $region29: #{image_pool_forward.2} parent=5 // pred_check
      _
    $region30: #{image_pool_forward.2} parent=5 // pred_check_branch
      %160 = sbr.rel (%p157) target = $region32
    $region31: #{image_pool_forward.2} parent=5 // pred_region
      %s161 = ssub.s32 %s9, 1
      %s162 = smul.u32 2, %s19
      %p163 = scmp.lt.s32.totalorder %s18, 1
      %s164 = scalar_select %p163, %s18, 1
      %p165 = scmp.lt.s32.totalorder %s162, 1
      %s166 = scalar_select %p165, %s162, 1
      %s167 = smul.addr %s164, 2
      %s168 = sadd.s32 %s166, %s167
      %s169 = smul.addr %s168, 4
      %s170 = scalar_lea.vmem %s0, %s169
      %p171 = pneg %p49
      %p172 = pneg %p46
      %p173 = pneg %p70
      %p174 = pneg %p67
      %p175 = pneg %p91
      %p176 = pneg %p88
      %p177 = pneg %p117
      %p178 = pneg %p114
      %p179 = scmp.lt.s32.totalorder %s18, 1
      %s180 = scalar_select %p179, %s18, 1
      %s181 = smul.addr %s180, 8
      %s182 = scalar_lea.vmem %s3, %s181
      %s183 = smul.u32 2, %s19
      %p184 = scmp.lt.s32.totalorder %s18, 1
      %s185 = scalar_select %p184, %s18, 1
      %p186 = scmp.lt.s32.totalorder %s183, 1
      %s187 = scalar_select %p186, %s183, 1
      %s188 = smul.addr %s185, 2
      %s189 = sadd.s32 %s187, %s188
      %s190 = smul.addr %s189, 4
      %s191 = scalar_lea.vmem %s0, %s190
      %s192 = smul.u32 2, %s19
      %p193 = scmp.lt.s32.totalorder %s18, 1
      %s194 = scalar_select %p193, %s18, 1
      %s195 = smul.addr %s194, 8
      %s196 = scalar_lea.vmem %s3, %s195
      %p197 = scmp.eq.s32.totalorder %s19, 0
      // Predicated region
      $region33: #{image_pool_forward.2} parent=31 // pred_check
        %p198 = pneg %p197
      $region34: #{image_pool_forward.2} parent=31 // pred_check_branch
        %200 = sbr.rel (%p198) target = $region36
      $region35: #{image_pool_forward.2} parent=31 // pred_region
        %vm201 = vcmask 3072
        %202 = vst.msk [vmem:[#allocation2] sm:$0xf] %vm201, 0.0
      $region36: #{image_pool_forward.2} parent=31 // pred_fallthru
        _
      %v203 = vld [vmem:[%s191] sm:$0xff]
      %v204 = vld [vmem:[#allocation2] sm:$0xf]
      %206 = vst [vmem:[#allocation1] ss:$2 sm:$0xff] %v203
      %v207 = vld.sshfl [vmem:[#allocation1] sm:$0xff pattern:$0x75316420]
      %v208 = vld.sshfl [vmem:[#allocation1 + $0x8] sm:$0xff pattern:$0x75316420]
      %vm211 = vcmask 1043456
      %v212 = vsel %vm211, %v207, 0.0
      %v213 = vsel %vm211, %v208, 0.0
      %v214 = vadd.f32 %v212, %v213
      %215 = vadd.xlane.f32.xlu0 %v214
      %v216 = vpop.xlane.xlu0 %215
      %v217 = vadd.f32 %v204, %v216
      %vm218 = vcmask 3072
      %219 = vst.msk [vmem:[#allocation2] sm:$0xf] %vm218, %v217
      // Predicated region
      $region37: #{image_pool_forward.2} parent=31 // pred_check
        %p220 = pneg %p197
      $region38: #{image_pool_forward.2} parent=31 // pred_check_branch
        %222 = sbr.rel (%p220) target = $region40
      $region39: #{image_pool_forward.2} parent=31 // pred_region
        %v223 = vld [vmem:[#allocation2] sm:$0xf]
        %v224 = vmul.f32 %v223, 0.00390625
        %v225 = vld [vmem:[%s1] sm:$0xff]
        %vm226 = vcmask 31744
        %v228 = vsel %vm226, %v225, 0
        %v231 = vsel %vm211, %v224, 0
        %233 = vmatpush.msra.mxu0 0.0
        %234 = vmatpush.msra.mxu0 0.0
        %235 = vmatpush.msra.mxu0 0.0
        %236 = vmatpush.msra.mxu0 0.0
        %237 = vmatpush.msra.mxu0 0.0
        %238 = vmatpush.msra.mxu0 0.0
        %239 = vmatpush.msra.mxu0 0.0
        %240 = vmatpush.msra.mxu0 0.0
        %241 = vmatpush.msra.mxu0 0.0
        %242 = vmatpush.msra.mxu0 0.0
        %243 = vmatpush.msra.mxu0 0.0
        %244 = vmatpush.msra.mxu0 0.0
        %245 = vmatpush.msra.mxu0 0.0
        %246 = vmatpush.msra.mxu0 0.0
        %247 = vmatpush.msra.mxu0 0.0
        %248 = vmatpush.msra.mxu0 %v231
        %249 = vmatmul.f32.gmra.mxu0 %v228
        %v250 = vpop.f32.mrf.mxu0
        %v251 = vadd.f32 0.0, %v250
        %252 = vdwg.mxu0
        %v253 = vld [vmem:[%s2] sm:$0xff]
        %v254 = vmul.f32 %v253, %v251
        %256 = vrot.lane.b32.xlu0 %v253, 127
        %v257 = vpop.permute.xlu0 %256
        %v259 = vadd.f32 %v254, %v257
        %v260 = vmax.f32 %v259, 0.0
        %262 = vrot.lane.b32.xlu0 %v260, 2
        %v263 = vpop.permute.xlu0 %262
        %v265 = vmul.f32 %v253, %v263
        %v266 = vadd.f32 %v265, %v257
        %v267 = vmax.f32 %v266, 0.0
        %269 = vrot.lane.b32.xlu0 %v267, 126
        %v270 = vpop.permute.xlu0 %269
        %vm272 = vcmask 7168
        %273 = vst.msk [vmem:[%s196] sm:$0xff] %vm272, %v270
      $region40: #{image_pool_forward.2} parent=31 // pred_fallthru
        _
      %p274 = scmp.lt.s32.totalorder %s18, 1
      %s275 = scalar_select %p274, %s18, 1
      %s276 = smul.addr %s275, 8
      %s277 = scalar_lea.vmem %s3, %s276
      // Predicated region
      $region41: #{image_pool_forward.2} parent=31 // pred_check
        %p278 = pneg %p114
      $region42: #{image_pool_forward.2} parent=31 // pred_check_branch
        %280 = sbr.rel (%p278) target = $region44
      $region43: #{image_pool_forward.2} parent=31 // pred_region
        _
      $region44: #{image_pool_forward.2} parent=31 // pred_fallthru
        _
    $region32: #{image_pool_forward.2} parent=5 // pred_fallthru
      _
    %p281 = scmp.le.s32.totalorder 2, %s9
    // Predicated region
    $region45: #{image_pool_forward.2} parent=5 // pred_check
      %p282 = pneg %p281
    $region46: #{image_pool_forward.2} parent=5 // pred_check_branch
      %284 = sbr.rel (%p282) target = $region48
    $region47: #{image_pool_forward.2} parent=5 // pred_region
      %s285 = ssub.s32 %s9, 2
      // Predicated region
      $region49: #{image_pool_forward.2} parent=47 // pred_check
        %p286 = pneg %p120
      $region50: #{image_pool_forward.2} parent=47 // pred_check_branch
        %288 = sbr.rel (%p286) target = $region52
      $region51: #{image_pool_forward.2} parent=47 // pred_region
        %p289 = scmp.lt.s32.totalorder %s20, 1
        %s290 = scalar_select %p289, %s20, 1
        %s291 = smul.addr %s290, 8
        %s292 = scalar_lea.vmem %s3, %s291
      $region52: #{image_pool_forward.2} parent=47 // pred_fallthru
        _
    $region48: #{image_pool_forward.2} parent=5 // pred_fallthru
      _
  $region6: #{image_pool_forward.2} parent=0 // loop_footer
    %s13 = sadd.s32 1, %s9
  $region7: #{image_pool_forward.2} parent=0 // loop_footer_branch
    %8 = sbr.rel target = $region3
  $region8: #{image_pool_forward.2} parent=0 // loop_exit
    _

</llo_original>
